<compile_context>
chip_gen: v5e
topology: v5e:2x2
jax: 0.10.0
libtpu: 0.0.40
codegen_flags: <defaults>
</compile_context>

<pallas_src>
import jax
import jax.numpy as jnp
from jax.experimental import pallas as pl
from jax.experimental.pallas import tpu as pltpu


# ----------------------------- Pallas kernel ------------------------------ #
def _conv_matmul_kernel(w_ref, p_ref, b_ref, o_ref):
    """One M-tile of the transposed im2col matmul.

    w_ref: (Cout, Kp)     resident reshaped conv weight (K zero-padded to 8x)
    p_ref: (Kp, M_blk)    im2col patch tile, pixels on the lane axis
    b_ref: (Cout, 1)      resident bias
    o_ref: (Cout, M_blk)  lane-dense, channel-major output tile
    """
    o_ref[...] = (
        jnp.dot(w_ref[...], p_ref[...], preferred_element_type=jnp.float32)
        + b_ref[...]
    )


def _pick_m_block(m_total, max_block=2048):
    """Lane-dense block along the flattened pixel axis: a multiple of 128,
    large enough to amortize per-step overhead, but small enough to keep
    >= 2 grid steps (v7x megacore) whenever the problem allows it."""
    blk = 128
    while blk * 4 <= m_total and blk < max_block:
        blk *= 2
    return blk


def yuzhao_forward(x, weight, bias):
    """Conv2d(3, 32, 5) forward.  x: (N, 3, H, W) f32 NCHW (PyTorch layout)."""
    n, cin, h, w = x.shape
    cout, cin_w, kh, kw = weight.shape
    assert cin == cin_w
    oh, ow = h - kh + 1, w - kw + 1
    k = kh * kw * cin
    m_total = n * oh * ow

    # ---- XLA-side lane-friendly im2col repack (tiny layout glue) ---------- #
    x_nhwc = jnp.transpose(x, (0, 2, 3, 1))                       # (N,H,W,Cin)
    slabs = [x_nhwc[:, i:i + oh, j:j + ow, :]
             for i in range(kh) for j in range(kw)]                # 25x (N,OH,OW,Cin)
    patches = jnp.stack(slabs, axis=3)                             # (N,OH,OW,KH*KW,Cin)
    patches = patches.reshape(m_total, k).T                        # (K, M) pixels on lanes

    k_pad = ((k + 7) // 8) * 8                                     # sublane-aligned K
    m_block = _pick_m_block(m_total)
    n_tiles = -(-m_total // m_block)                               # cdiv
    m_pad = n_tiles * m_block

    patches = jnp.pad(patches, ((0, k_pad - k), (0, m_pad - m_total)))
    w2d = jnp.pad(
        jnp.transpose(weight, (0, 2, 3, 1)).reshape(cout, k),      # (Cout, K)
        ((0, 0), (0, k_pad - k)),
    )
    b2d = bias.reshape(cout, 1)

    cost = pl.CostEstimate(
        flops=2 * m_pad * k_pad * cout,
        transcendentals=0,
        bytes_accessed=4 * (patches.size + w2d.size + b2d.size + cout * m_pad),
    )

    out2d = pl.pallas_call(
        _conv_matmul_kernel,
        out_shape=jax.ShapeDtypeStruct((cout, m_pad), jnp.float32),
        grid=(n_tiles,),
        in_specs=[
            # Weight and bias resident for the whole grid (constant index_map).
            pl.BlockSpec((cout, k_pad), lambda m: (0, 0)),
            # Patch tile: full K, one lane-dense M block per grid step.
            pl.BlockSpec((k_pad, m_block), lambda m: (0, m)),
            pl.BlockSpec((cout, 1), lambda m: (0, 0)),
        ],
        out_specs=pl.BlockSpec((cout, m_block), lambda m: (0, m)),
        compiler_params=pltpu.CompilerParams(
            dimension_semantics=("parallel",),
            vmem_limit_bytes=32 << 20,   # explicit; well above the <200 KB/step used
        ),
        cost_estimate=cost,
    )(w2d, patches, b2d)

    # Drop the M padding, un-flatten pixels and restore NCHW (cheap XLA glue).
    out = out2d[:, :m_total].reshape(cout, n, oh, ow)
    return jnp.transpose(out, (1, 0, 2, 3))


if __name__ == "__main__":
    key = jax.random.PRNGKey(0)
    kx, kwt, kb = jax.random.split(key, 3)

    # Small shapes consistent with Conv2d(3, 32, 5): N=2, C=3, H=W=16.
    x = jax.random.normal(kx, (2, 3, 16, 16), dtype=jnp.float32)
    weight = jax.random.normal(kwt, (32, 3, 5, 5), dtype=jnp.float32) * 0.1
    bias = jax.random.normal(kb, (32,), dtype=jnp.float32) * 0.1

    out = jax.block_until_ready(yuzhao_forward(x, weight, bias))
    assert out.shape == (2, 32, 12, 12), out.shape

    # Cross-check against XLA's native convolution (NCHW / OIHW).
    ref = jax.lax.conv_general_dilated(
        x, weight, window_strides=(1, 1), padding="VALID",
        dimension_numbers=("NCHW", "OIHW", "NCHW"),
    ) + bias.reshape(1, 32, 1, 1)
    assert jnp.allclose(out, ref, atol=1e-3, rtol=1e-3), float(
        jnp.max(jnp.abs(out - ref))
    )

    print("KERNEL_OK")
</pallas_src>

<mosaic_0001>
module attributes {stable_mosaic.version = 11 : i64} {
  func.func @_conv_matmul_kernel(%arg0: i32, %arg1: memref<32x80xf32, #tpu.memory_space<vmem>>, %arg2: memref<80x128xf32, #tpu.memory_space<vmem>>, %arg3: memref<32x1xf32, #tpu.memory_space<vmem>>, %arg4: memref<32x128xf32, #tpu.memory_space<vmem>>) attributes {dimension_semantics = [#tpu.dimension_semantics<parallel>], iteration_bounds = array<i64: 3>, scalar_prefetch = 0 : i64, scratch_operands = 0 : i64, tpu.core_type = #tpu.core_type<tc>, window_params = [{pipeline_mode = #tpu.pipeline_mode<synchronous>, transform_indices = @transform_0, window_bounds = array<i64: 32, 80>}, {transform_indices = @transform_1, window_bounds = array<i64: 80, 128>}, {pipeline_mode = #tpu.pipeline_mode<synchronous>, transform_indices = @transform_2, window_bounds = array<i64: 32, 1>}, {transform_indices = @transform_3, window_bounds = array<i64: 32, 128>}]} {
    %c0 = arith.constant 0 : index
    %c0_0 = arith.constant 0 : index
    %0 = vector.load %arg1[%c0, %c0_0] : memref<32x80xf32, #tpu.memory_space<vmem>>, vector<32x80xf32>
    %c0_1 = arith.constant 0 : index
    %c0_2 = arith.constant 0 : index
    %1 = vector.load %arg2[%c0_1, %c0_2] : memref<80x128xf32, #tpu.memory_space<vmem>>, vector<80x128xf32>
    %cst = arith.constant dense<0.000000e+00> : vector<32x128xf32>
    %2 = tpu.matmul %0, %1, %cst {dimension_numbers = #tpu.dot_dimension_numbers<[1], [0], [0], [1], [0, 0, 1, 1], [], []>} : vector<32x80xf32>, vector<80x128xf32>, vector<32x128xf32> -> vector<32x128xf32>
    %c0_3 = arith.constant 0 : index
    %c0_4 = arith.constant 0 : index
    %3 = vector.load %arg3[%c0_3, %c0_4] : memref<32x1xf32, #tpu.memory_space<vmem>>, vector<32x1xf32>
    %4 = vector.broadcast %3 : vector<32x1xf32> to vector<32x128xf32>
    %5 = arith.addf %2, %4 : vector<32x128xf32>
    %c0_5 = arith.constant 0 : index
    %c0_6 = arith.constant 0 : index
    %6 = vector.load %arg4[%c0_5, %c0_6] : memref<32x128xf32, #tpu.memory_space<vmem>>, vector<32x128xf32>
    tpu.vector_store %arg4[%c0_5, %c0_6], %5 {strides = array<i32>} : memref<32x128xf32, #tpu.memory_space<vmem>>, vector<32x128xf32>,
    return
  }
  func.func @transform_0(%arg0: i32) -> (i32, i32) {
    %c0_i32 = arith.constant 0 : i32
    %c0_i32_0 = arith.constant 0 : i32
    %c0_i32_1 = arith.constant 0 : i32
    return %c0_i32, %c0_i32_0 : i32, i32
  }
  func.func @transform_1(%arg0: i32) -> (i32, i32) {
    %c0_i32 = arith.constant 0 : i32
    %c0_i32_0 = arith.constant 0 : i32
    return %c0_i32, %arg0 : i32, i32
  }
  func.func @transform_2(%arg0: i32) -> (i32, i32) {
    %c0_i32 = arith.constant 0 : i32
    %c0_i32_0 = arith.constant 0 : i32
    %c0_i32_1 = arith.constant 0 : i32
    return %c0_i32, %c0_i32_0 : i32, i32
  }
  func.func @transform_3(%arg0: i32) -> (i32, i32) {
    %c0_i32 = arith.constant 0 : i32
    %c0_i32_0 = arith.constant 0 : i32
    return %c0_i32, %arg0 : i32, i32
  }
}

</mosaic_0001>

<llo_original>
// kernel: tpu_custom_call.1
$region0: #{tpu_custom_call.1}
  #allocation0 [shape = 'u32[]', space=smem, size = 0x4, offset = 0x4, fixed_abs, tag = 'smem constant byte address 0x4 - core index']
  #allocation1 [shape = 'u32[72,128]{1,0:T(1,128)}', space=vmem, size = 0x9000, scoped, tag = 'internal scratch']
  %s0 = inlined_call_operand.vmem [shape: f32[32,80], index: 0, kind: input, shape index: {}]
  %s1 = inlined_call_operand.hbm [shape: f32[80,384], index: 1, kind: input, shape index: {}]
  %s2 = inlined_call_operand.vmem [shape: f32[32,1], index: 2, kind: input, shape index: {}]
  %s3 = inlined_call_operand.hbm [shape: f32[32,384], index: 3, kind: output, shape index: {}]
  %s4 = sld [smem:[#allocation0]]
  $region49: #{tpu_custom_call.1} parent=0
    _
  %s6 = ssub.s32 1, %s4
  %s7 = scalar_select 0, %s6, %s4
  $region1: #{tpu_custom_call.1} parent=0
    #allocation2 [shape = 'u8[81920]{0}', space=vmem, size = 0x14000, scoped, tag = 'input window, operand 1']
    #allocation3 [shape = 's32[2]{0}', space=sflag, size = 0x8, scoped, tag = 'scoped memory for tpu_custom_call.1']
    #allocation4 [shape = 's32[2]{0}', space=sflag, size = 0x8, scoped, tag = 'scoped memory for tpu_custom_call.1']
    #allocation5 [shape = 'u8[32768]{0}', space=vmem, size = 0x8000, scoped, tag = 'output window, operand 0']
    %8 = vsyncpa [#allocation3], 0
    %s9 = scalar_lea.sflag [#allocation3], 1
    %10 = vsyncpa %s9, 0
    %11 = vsyncpa [#allocation4], 0
    %s12 = scalar_lea.sflag [#allocation4], 1
    %13 = vsyncpa %s12, 0
    loop: start=0, step=1, limit=5
    $region2: #{tpu_custom_call.1} parent=1 // loop_pre_header
      _
    $region3: #{tpu_custom_call.1} parent=1 // loop_header
      %s15 = sphi 0, %s19
      %p16 = scmp.ge.s32.totalorder %s15, 5
      %s23 = sphi 0, %s23
      %s25 = sphi 0, %s23
      %s26 = sphi 0, %s25
      %s40 = sphi 0, %s26
      %s46 = sphi 0, %s48
      %s49 = sphi 0, %s46
      %s50 = sphi 0, %s49
      %s66 = sphi 0, %s50
      %s70 = sphi 0, %s70
      %s72 = sphi 0, %s70
      %s73 = sphi 0, %s72
      %s87 = sphi 0, %s73
      %s93 = sphi 0, %s95
      %s96 = sphi 0, %s93
      %s97 = sphi 0, %s96
      %s113 = sphi 0, %s97
    $region4: #{tpu_custom_call.1} parent=1 // loop_header_branch
      %18 = sbr.rel (%p16) target = $region8
    $region5: #{tpu_custom_call.1} parent=1 // loop_body
      %s20 = ssub.s32 %s15, 1
      %s21 = ssub.s32 %s15, 2
      %s22 = sadd.s32 %s15, 1
      %s24 = sadd.s32 %s23, 1
      %p27 = scmp.eq.s32.totalorder %s15, 2
      %p28 = scmp.ne.s32.totalorder %s23, %s25
      %p29 = scmp.eq.s32.totalorder %s15, 0
      %p30 = por %p28, %p29
      %p31 = scmp.ne.s32.totalorder %s23, %s25
      %p32 = scmp.eq.s32.totalorder %s20, 2
      %p33 = por %p31, %p32
      %p34 = scmp.ne.s32.totalorder %s25, %s26
      %p35 = scmp.eq.s32.totalorder %s20, 0
      %p36 = por %p34, %p35
      %p37 = scmp.ne.s32.totalorder %s25, %s26
      %p38 = scmp.eq.s32.totalorder %s21, 2
      %p39 = por %p37, %p38
      %p41 = scmp.ne.s32.totalorder %s26, %s40
      %p42 = scmp.eq.s32.totalorder %s21, 0
      %p43 = por %p41, %p42
      %s44 = ssub.s32 %s15, %s22
      %p45 = scmp.eq.s32.totalorder %s44, 0
      %s47 = sadd.s32 %s46, 1
      %s48 = scalar_select %p45, %s46, %s47
      %p51 = pneg %p45
      %p52 = scmp.eq.s32.totalorder %s15, 2
      %p53 = por %p51, %p52
      %p54 = scmp.ne.s32.totalorder %s46, %s49
      %p55 = scmp.eq.s32.totalorder %s15, 0
      %p56 = por %p54, %p55
      %p57 = scmp.ne.s32.totalorder %s46, %s49
      %p58 = scmp.eq.s32.totalorder %s20, 2
      %p59 = por %p57, %p58
      %p60 = scmp.ne.s32.totalorder %s49, %s50
      %p61 = scmp.eq.s32.totalorder %s20, 0
      %p62 = por %p60, %p61
      %p63 = scmp.ne.s32.totalorder %s49, %s50
      %p64 = scmp.eq.s32.totalorder %s21, 2
      %p65 = por %p63, %p64
      %p67 = scmp.ne.s32.totalorder %s50, %s66
      %p68 = scmp.eq.s32.totalorder %s21, 0
      %p69 = por %p67, %p68
      %s71 = sadd.s32 %s70, 1
      %p74 = scmp.eq.s32.totalorder %s15, 2
      %p75 = scmp.ne.s32.totalorder %s70, %s72
      %p76 = scmp.eq.s32.totalorder %s15, 0
      %p77 = por %p75, %p76
      %p78 = scmp.ne.s32.totalorder %s70, %s72
      %p79 = scmp.eq.s32.totalorder %s20, 2
      %p80 = por %p78, %p79
      %p81 = scmp.ne.s32.totalorder %s72, %s73
      %p82 = scmp.eq.s32.totalorder %s20, 0
      %p83 = por %p81, %p82
      %p84 = scmp.ne.s32.totalorder %s72, %s73
      %p85 = scmp.eq.s32.totalorder %s21, 2
      %p86 = por %p84, %p85
      %p88 = scmp.ne.s32.totalorder %s73, %s87
      %p89 = scmp.eq.s32.totalorder %s21, 0
      %p90 = por %p88, %p89
      %s91 = ssub.s32 %s15, %s22
      %p92 = scmp.eq.s32.totalorder %s91, 0
      %s94 = sadd.s32 %s93, 1
      %s95 = scalar_select %p92, %s93, %s94
      %p98 = pneg %p92
      %p99 = scmp.eq.s32.totalorder %s15, 2
      %p100 = por %p98, %p99
      %p101 = scmp.ne.s32.totalorder %s93, %s96
      %p102 = scmp.eq.s32.totalorder %s15, 0
      %p103 = por %p101, %p102
      %p104 = scmp.ne.s32.totalorder %s93, %s96
      %p105 = scmp.eq.s32.totalorder %s20, 2
      %p106 = por %p104, %p105
      %p107 = scmp.ne.s32.totalorder %s96, %s97
      %p108 = scmp.eq.s32.totalorder %s20, 0
      %p109 = por %p107, %p108
      %p110 = scmp.ne.s32.totalorder %s96, %s97
      %p111 = scmp.eq.s32.totalorder %s21, 2
      %p112 = por %p110, %p111
      %p114 = scmp.ne.s32.totalorder %s97, %s113
      %p115 = scmp.eq.s32.totalorder %s21, 0
      %p116 = por %p114, %p115
      %p117 = scmp.le.s32.totalorder 1, %s15
      %p118 = scmp.lt.s32.totalorder %s15, 4
      %p119 = pnand %p117, %p118
      %p120 = pneg %p119
      // Predicated region
      $region9: #{tpu_custom_call.1} parent=5 // pred_check
        _
      $region10: #{tpu_custom_call.1} parent=5 // pred_check_branch
        %122 = sbr.rel (%p119) target = $region12
      $region11: #{tpu_custom_call.1} parent=5 // pred_region
        %s123 = ssub.s32 %s15, 1
        // Predicated region
        $region13: #{tpu_custom_call.1} parent=11 // pred_check
          %p124 = pneg %p36
        $region14: #{tpu_custom_call.1} parent=11 // pred_check_branch
          %126 = sbr.rel (%p124) target = $region16
        $region15: #{tpu_custom_call.1} parent=11 // pred_region
          _
        $region16: #{tpu_custom_call.1} parent=11 // pred_fallthru
          _
        // Predicated region
        $region17: #{tpu_custom_call.1} parent=11 // pred_check
          %p127 = pneg %p83
        $region18: #{tpu_custom_call.1} parent=11 // pred_check_branch
          %129 = sbr.rel (%p127) target = $region20
        $region19: #{tpu_custom_call.1} parent=11 // pred_region
          _
        $region20: #{tpu_custom_call.1} parent=11 // pred_fallthru
          _
      $region12: #{tpu_custom_call.1} parent=5 // pred_fallthru
        _
      %p130 = scmp.lt.s32.totalorder %s15, 3
      // Predicated region
      $region21: #{tpu_custom_call.1} parent=5 // pred_check
        %p131 = pneg %p130
      $region22: #{tpu_custom_call.1} parent=5 // pred_check_branch
        %133 = sbr.rel (%p131) target = $region24
      $region23: #{tpu_custom_call.1} parent=5 // pred_region
        // Predicated region
        $region25: #{tpu_custom_call.1} parent=23 // pred_check
          %p134 = pneg %p56
        $region26: #{tpu_custom_call.1} parent=23 // pred_check_branch
          %136 = sbr.rel (%p134) target = $region28
        $region27: #{tpu_custom_call.1} parent=23 // pred_region
          %s137 = sand.u32 %s46, 1
          %s138 = scalar_lea.sflag [#allocation3], %s137
          %s139 = sand.u32 %s46, 1
          %s140 = smul.addr %s139, 80
          %s141 = scalar_lea.vmem [#allocation2], %s140
          %143 = vsyncadd %s138, 0
          %s144 = smul.addr %s15, 8
          %s145 = scalar_lea.hbm %s1, %s144
          %s146 = sshll.u32 %s145, 4
          %s147 = int_to_ptr.hbm [resolvable:$true] %s146
          %s148 = sshll.u32 %s141, 4
          %s149 = int_to_ptr.vmem [resolvable:$true] %s148
          %154 = dma.hbm_to_vmem [thread:$0]  %s147, 1280, %s149, %s138, 384, 128, 8
        $region28: #{tpu_custom_call.1} parent=23 // pred_fallthru
          _
      $region24: #{tpu_custom_call.1} parent=5 // pred_fallthru
        _
      %p155 = scmp.le.s32.totalorder 1, %s15
      %p156 = scmp.lt.s32.totalorder %s15, 4
      %p157 = pnand %p155, %p156
      %p158 = pneg %p157
      // Predicated region
      $region29: #{tpu_custom_call.1} parent=5 // pred_check
        _
      $region30: #{tpu_custom_call.1} parent=5 // pred_check_branch
        %160 = sbr.rel (%p157) target = $region32
      $region31: #{tpu_custom_call.1} parent=5 // pred_region
        %s161 = ssub.s32 %s15, 1
        %s162 = sand.u32 %s49, 1
        %s163 = scalar_lea.sflag [#allocation3], %s162
        %s164 = sand.u32 %s49, 1
        %s165 = smul.addr %s164, 80
        %s166 = scalar_lea.vmem [#allocation2], %s165
        // Predicated region
        $region33: #{tpu_custom_call.1} parent=31 // pred_check
          %p167 = pneg %p62
        $region34: #{tpu_custom_call.1} parent=31 // pred_check_branch
          %169 = sbr.rel (%p167) target = $region36
        $region35: #{tpu_custom_call.1} parent=31 // pred_region
          %171 = dma.done %s163, 1280
        $region36: #{tpu_custom_call.1} parent=31 // pred_fallthru
          _
        %p172 = pneg %p36
        %p173 = pneg %p33
        %s174 = sand.u32 %s49, 1
        %s175 = scalar_lea.sflag [#allocation3], %s174
        %s176 = sand.u32 %s49, 1
        %s177 = smul.addr %s176, 80
        %s178 = scalar_lea.vmem [#allocation2], %s177
        %p179 = pneg %p62
        %p180 = pneg %p59
        %p181 = pneg %p83
        %p182 = pneg %p80
        %p183 = pneg %p109
        %p184 = pneg %p106
        %s185 = sand.u32 %s96, 1
        %s186 = scalar_lea.sflag [#allocation4], %s185
        %s187 = sand.u32 %s96, 1
        %s188 = smul.addr %s187, 32
        %s189 = scalar_lea.vmem [#allocation5], %s188
        %v190 = vld [vmem:[%s0] sm:$0xff]
        %v191 = vld [vmem:[%s0 + $0x8] sm:$0xff]
        %v192 = vld [vmem:[%s0 + $0x10] sm:$0xff]
        %v193 = vld [vmem:[%s0 + $0x18] sm:$0xff]
        %v194 = vld [vmem:[%s166] sm:$0xff]
        %v195 = vld [vmem:[%s166 + $0x8] sm:$0xff]
        %v196 = vld [vmem:[%s166 + $0x10] sm:$0xff]
        %v197 = vld [vmem:[%s166 + $0x18] sm:$0xff]
        %v198 = vld [vmem:[%s166 + $0x20] sm:$0xff]
        %v199 = vld [vmem:[%s166 + $0x28] sm:$0xff]
        %v200 = vld [vmem:[%s166 + $0x30] sm:$0xff]
        %v201 = vld [vmem:[%s166 + $0x38] sm:$0xff]
        %v202 = vld [vmem:[%s166 + $0x40] sm:$0xff]
        %v203 = vld [vmem:[%s166 + $0x48] sm:$0xff]
        %v204 = vld [vmem:[%s2] sm:$0xff]
        %v205 = vld [vmem:[%s2 + $0x8] sm:$0xff]
        %v206 = vld [vmem:[%s2 + $0x10] sm:$0xff]
        %v207 = vld [vmem:[%s2 + $0x18] sm:$0xff]
        %209 = vset.pattern.permute.xlu0 0
        %210 = vperm.xlu0 %209, %v204
        %v211 = vpop.permute.xlu0 %210
        %214 = vset.pattern.permute.xlu0 0
        %215 = vperm.xlu0 %214, %v205
        %v216 = vpop.permute.xlu0 %215
        %219 = vset.pattern.permute.xlu0 0
        %220 = vperm.xlu0 %219, %v206
        %v221 = vpop.permute.xlu0 %220
        %224 = vset.pattern.permute.xlu0 0
        %225 = vperm.xlu0 %224, %v207
        %v226 = vpop.permute.xlu0 %225
        %vm228 = vcmask 654336
        %v230 = vsel %vm228, %v190, 0
        %v233 = vsel %vm228, %v191, 0
        %v236 = vsel %vm228, %v192, 0
        %v239 = vsel %vm228, %v193, 0
        %241 = vmatpush.msra.mxu0 0.0
        %242 = vmatpush.msra.mxu0 0.0
        %243 = vmatpush.msra.mxu0 0.0
        %244 = vmatpush.msra.mxu0 0.0
        %245 = vmatpush.msra.mxu0 0.0
        %246 = vmatpush.msra.mxu0 0.0
        %247 = vmatpush.msra.mxu0 %v203
        %248 = vmatpush.msra.mxu0 %v202
        %249 = vmatpush.msra.mxu0 %v201
        %250 = vmatpush.msra.mxu0 %v200
        %251 = vmatpush.msra.mxu0 %v199
        %252 = vmatpush.msra.mxu0 %v198
        %253 = vmatpush.msra.mxu0 %v197
        %254 = vmatpush.msra.mxu0 %v196
        %255 = vmatpush.msra.mxu0 %v195
        %256 = vmatpush.msra.mxu0 %v194
        %257 = vmatmul.f32.gmra.mxu0 %v230
        %v258 = vpop.f32.mrf.mxu0
        %v259 = vadd.f32 %v211, %v258
        %260 = vmatmul.f32.gmra.mxu0 %v233
        %v261 = vpop.f32.mrf.mxu0
        %v262 = vadd.f32 %v216, %v261
        %263 = vmatmul.f32.gmra.mxu0 %v236
        %v264 = vpop.f32.mrf.mxu0
        %v265 = vadd.f32 %v221, %v264
        %266 = vmatmul.f32.gmra.mxu0 %v239
        %v267 = vpop.f32.mrf.mxu0
        %v268 = vadd.f32 %v226, %v267
        %269 = vdwg.mxu0
        %270 = vst [vmem:[%s189] sm:$0xff] %v259
        %271 = vst [vmem:[%s189 + $0x8] sm:$0xff] %v262
        %272 = vst [vmem:[%s189 + $0x10] sm:$0xff] %v265
        %273 = vst [vmem:[%s189 + $0x18] sm:$0xff] %v268
        %s274 = sand.u32 %s96, 1
        %s275 = scalar_lea.sflag [#allocation4], %s274
        %s276 = sand.u32 %s96, 1
        %s277 = smul.addr %s276, 32
        %s278 = scalar_lea.vmem [#allocation5], %s277
        // Predicated region
        $region37: #{tpu_custom_call.1} parent=31 // pred_check
          %p279 = pneg %p106
        $region38: #{tpu_custom_call.1} parent=31 // pred_check_branch
          %281 = sbr.rel (%p279) target = $region40
        $region39: #{tpu_custom_call.1} parent=31 // pred_region
          %283 = vsyncadd %s275, 0
          %s284 = smul.addr %s20, 8
          %s285 = scalar_lea.hbm %s3, %s284
          %s286 = sshll.u32 %s278, 4
          %s287 = int_to_ptr.vmem [resolvable:$true] %s286
          %s288 = sshll.u32 %s285, 4
          %s289 = int_to_ptr.hbm [resolvable:$true] %s288
          %294 = dma.vmem_to_hbm [thread:$0]  %s287, 512, %s289, %s275, 128, 384, 8
        $region40: #{tpu_custom_call.1} parent=31 // pred_fallthru
          _
      $region32: #{tpu_custom_call.1} parent=5 // pred_fallthru
        _
      %p295 = scmp.le.s32.totalorder 2, %s15
      // Predicated region
      $region41: #{tpu_custom_call.1} parent=5 // pred_check
        %p296 = pneg %p295
      $region42: #{tpu_custom_call.1} parent=5 // pred_check_branch
        %298 = sbr.rel (%p296) target = $region44
      $region43: #{tpu_custom_call.1} parent=5 // pred_region
        %s299 = ssub.s32 %s15, 2
        // Predicated region
        $region45: #{tpu_custom_call.1} parent=43 // pred_check
          %p300 = pneg %p112
        $region46: #{tpu_custom_call.1} parent=43 // pred_check_branch
          %302 = sbr.rel (%p300) target = $region48
        $region47: #{tpu_custom_call.1} parent=43 // pred_region
          %s303 = sand.u32 %s97, 1
          %s304 = scalar_lea.sflag [#allocation4], %s303
          %s305 = sand.u32 %s97, 1
          %s306 = smul.addr %s305, 32
          %s307 = scalar_lea.vmem [#allocation5], %s306
          %309 = dma.done %s304, 512
        $region48: #{tpu_custom_call.1} parent=43 // pred_fallthru
          _
      $region44: #{tpu_custom_call.1} parent=5 // pred_fallthru
        _
    $region6: #{tpu_custom_call.1} parent=1 // loop_footer
      %s19 = sadd.s32 1, %s15
    $region7: #{tpu_custom_call.1} parent=1 // loop_footer_branch
      %14 = sbr.rel target = $region3
    $region8: #{tpu_custom_call.1} parent=1 // loop_exit
      _
    %310 = vsyncpa [#allocation3], 1
    %s311 = scalar_lea.sflag [#allocation3], 1
    %312 = vsyncpa %s311, 1
    %313 = vsyncpa [#allocation4], 1
    %s314 = scalar_lea.sflag [#allocation4], 1
    %315 = vsyncpa %s314, 1

</llo_original>
